<compile_context>
chip_gen: v5e
topology: v5e:2x2
jax: 0.10.0
libtpu: 0.0.40
codegen_flags: <defaults>
</compile_context>

<pallas_src>
import functools

import jax
import jax.numpy as jnp
from jax import lax
from jax.experimental import pallas as pl
from jax.experimental.pallas import tpu as pltpu

EPS = 1e-5  # torch.nn.BatchNorm2d default


# --------------------------------------------------------------------------
# pltpu.roll sign-convention probe (one tiny kernel, cached).  We want
# shifted[..., i] == src[..., (i + d) % M]; wrapped lanes are always masked.
# --------------------------------------------------------------------------
@functools.lru_cache(maxsize=None)
def _roll_sign() -> int:
    """+1 if pltpu.roll(x, s, axis) == jnp.roll(x, s, axis), else -1."""

    def probe(x_ref, o_ref):
        o_ref[...] = pltpu.roll(x_ref[...], 1, axis=1)

    x = jnp.tile(jnp.arange(128, dtype=jnp.float32)[None, :], (8, 1))
    y = pl.pallas_call(
        probe, out_shape=jax.ShapeDtypeStruct((8, 128), jnp.float32)
    )(x)
    return 1 if int(y[0, 0]) == 127 else -1


def _lane_shift(src, d, roll_sign):
    """Return s with s[..., i] = src[..., (i + d) mod M] (XLU lane rotate)."""
    m = src.shape[-1]
    if d % m == 0:
        return src
    return pltpu.roll(src, (roll_sign * -d) % m, axis=1)


def _im2col(src, H, W, roll_sign):
    """(C, Mb) -> (9*C, Mb) 3x3 SAME-padding patches.

    Lane rotations + per-image border masks (M is flattened (n, h, w), blocks
    start at sample boundaries so block-edge wrap only hits masked lanes).
    Only corner taps need a combined mask; edge taps need one; centre needs none.
    """
    _, Mb = src.shape
    idx = lax.broadcasted_iota(jnp.int32, (1, Mb), 1)
    w_pos = idx % W
    h_pos = (idx // W) % H
    f32 = jnp.float32
    h_lo = (h_pos >= 1).astype(f32)       # valid source row for dh = -1
    h_hi = (h_pos <= H - 2).astype(f32)   # valid source row for dh = +1
    w_lo = (w_pos >= 1).astype(f32)
    w_hi = (w_pos <= W - 2).astype(f32)
    tap_mask = {
        (-1, -1): h_lo * w_lo, (-1, 0): h_lo, (-1, 1): h_lo * w_hi,
        (0, -1): w_lo,         (0, 0): None, (0, 1): w_hi,
        (1, -1): h_hi * w_lo,  (1, 0): h_hi, (1, 1): h_hi * w_hi,
    }
    cols = []
    for dh in (-1, 0, 1):
        for dw in (-1, 0, 1):
            v = _lane_shift(src, dh * W + dw, roll_sign)
            m = tap_mask[(dh, dw)]
            if m is not None:
                v = v * m
            cols.append(v)
    return jnp.concatenate(cols, axis=0)


# --------------------------------------------------------------------------
# Pass 1: fused conv1(3x3)+shortcut(1x1) -> per-block partial BN statistics.
# --------------------------------------------------------------------------
def _stats_kernel(x_ref, wc_ref, stats_ref, *, H, W, roll_sign, mxu_dtype):
    x = x_ref[...].astype(jnp.float32)                       # (Cin_p, Mb)
    p1 = _im2col(x, H, W, roll_sign).astype(mxu_dtype)       # (9*Cin_p, Mb)
    acc = jnp.dot(wc_ref[...], p1,
                  preferred_element_type=jnp.float32)        # (2*Cout, Mb)
    # conv biases b1/bs omitted: cancelled by BN mean subtraction (full-batch
    # stats assembled across all blocks in the wrapper).
    s1 = jnp.sum(acc, axis=1, keepdims=True)                 # (2*Cout, 1)
    s2 = jnp.sum(acc * acc, axis=1, keepdims=True)           # (2*Cout, 1)
    stats_ref[...] = jnp.concatenate([s1, s2], axis=1)[None]  # (1, 2*Cout, 2)


# --------------------------------------------------------------------------
# Pass 2: recompute conv1+shortcut, folded BN, ReLU, conv2(3x3), residual add.
# --------------------------------------------------------------------------
def _apply_kernel(x_ref, wc_ref, w2_ref, scale_ref, shift_ref, b2_ref, out_ref,
                  *, H, W, roll_sign, mxu_dtype):
    Cout = out_ref.shape[0]
    x = x_ref[...].astype(jnp.float32)
    p1 = _im2col(x, H, W, roll_sign).astype(mxu_dtype)       # (9*Cin_p, Mb)
    acc = jnp.dot(wc_ref[...], p1,
                  preferred_element_type=jnp.float32)        # (2*Cout, Mb)
    norm = acc * scale_ref[...] + shift_ref[...]             # folded BN
    y1 = jnp.maximum(norm[:Cout, :], 0.0)                    # main branch
    sc = norm[Cout:, :]                                      # shortcut branch
    p2 = _im2col(y1, H, W, roll_sign).astype(mxu_dtype)      # (9*Cout, Mb)
    y2 = jnp.dot(w2_ref[...], p2,
                 preferred_element_type=jnp.float32)         # (Cout, Mb)
    out_ref[...] = (y2 + b2_ref[...] + sc).astype(out_ref.dtype)


# --------------------------------------------------------------------------
# Wrapper
# --------------------------------------------------------------------------
def _pick_block_batch(N, HW, max_block_lanes):
    """Largest Nb | N with Nb*HW <= max_block_lanes and Nb*HW % 128 == 0."""
    cands = [nb for nb in range(1, N + 1)
             if N % nb == 0 and (nb * HW) % 128 == 0]
    if not cands:
        return N                       # single block == full array dims
    within = [nb for nb in cands if nb * HW <= max_block_lanes]
    return max(within) if within else min(cands)


def lane_dense_to_nchw(y_cm, N, H, W):
    """(C, N*H*W) lane-dense output -> NCHW (outside the kernel hot path)."""
    C = y_cm.shape[0]
    return jnp.transpose(y_cm.reshape(C, N, H, W), (1, 0, 2, 3))


def stem_forward(x_nchw, p, *, max_block_lanes=4096, mxu_dtype=jnp.float32):
    """x_nchw: (N, Cin, H, W) f32 -> lane-dense (Cout, N*H*W) f32."""
    N, Cin, H, W = x_nchw.shape
    Cout = p["w1"].shape[-1]
    assert Cout % 8 == 0, "Cout must be a multiple of 8 sublanes"
    HW = H * W
    M = N * HW
    Cin_p = ((Cin + 7) // 8) * 8

    Nb = _pick_block_batch(N, HW, max_block_lanes)
    nblk = N // Nb
    Mb = Nb * HW

    # Layout prep (tiny for a stem: Cin=3).
    # TODO(synk): fuse this NCHW -> (C, N*H*W) relayout into the producer.
    x_flat = jnp.zeros((Cin_p, M), jnp.float32)
    x_flat = x_flat.at[:Cin].set(
        jnp.transpose(x_nchw, (1, 0, 2, 3)).reshape(Cin, M))

    # fused conv1(3x3) + 1x1-shortcut weights -> (2*Cout, 9*Cin_p);
    # shortcut weights occupy the centre-tap rows of the second Cout block.
    w1_p = jnp.pad(p["w1"], ((0, 0), (0, 0), (0, Cin_p - Cin), (0, 0)))
    w1_flat = w1_p.reshape(9 * Cin_p, Cout)
    ws_block = jnp.zeros((9 * Cin_p, Cout), jnp.float32)
    ws_block = ws_block.at[4 * Cin_p:4 * Cin_p + Cin, :].set(p["ws"])
    wc = jnp.concatenate([w1_flat, ws_block], axis=1).T.astype(mxu_dtype)
    w2 = p["w2"].reshape(9 * Cout, Cout).T.astype(mxu_dtype)   # (Cout, 9*Cout)

    gamma = jnp.concatenate([p["g1"].reshape(-1), p["gs"].reshape(-1)])
    beta = jnp.concatenate([p["be1"].reshape(-1), p["bes"].reshape(-1)])
    b2 = p["b2"].reshape(Cout, 1)

    rs = _roll_sign()
    cparams = pltpu.CompilerParams(
        dimension_semantics=("parallel",),      # shards blocks across TCs on v7x
        vmem_limit_bytes=48 * 1024 * 1024,      # explicit, with v7x headroom
    )

    # ---- pass 1: per-block partial sum / sumsq of conv1+shortcut output ----
    stats = pl.pallas_call(
        functools.partial(_stats_kernel, H=H, W=W, roll_sign=rs,
                          mxu_dtype=mxu_dtype),
        grid=(nblk,),
        in_specs=[
            pl.BlockSpec((Cin_p, Mb), lambda i: (0, i)),
            pl.BlockSpec((2 * Cout, 9 * Cin_p), lambda i: (0, 0)),
        ],
        out_specs=pl.BlockSpec((1, 2 * Cout, 2), lambda i: (i, 0, 0)),
        out_shape=jax.ShapeDtypeStruct((nblk, 2 * Cout, 2), jnp.float32),
        compiler_params=cparams,
    )(x_flat, wc)

    # ---- tiny cross-block reduction -> folded BN scale/shift (train mode) ----
    s1 = jnp.sum(stats[:, :, 0], axis=0)                     # (2*Cout,)
    s2 = jnp.sum(stats[:, :, 1], axis=0)
    mean = s1 / M
    var = s2 / M - mean * mean                               # biased, f32
    inv = lax.rsqrt(var + EPS)
    scale = (gamma * inv).reshape(2 * Cout, 1).astype(jnp.float32)
    shift = (beta - mean * gamma * inv).reshape(2 * Cout, 1).astype(jnp.float32)

    # ---- pass 2: normalize + ReLU + conv2 + residual add ----
    out = pl.pallas_call(
        functools.partial(_apply_kernel, H=H, W=W, roll_sign=rs,
                          mxu_dtype=mxu_dtype),
        grid=(nblk,),
        in_specs=[
            pl.BlockSpec((Cin_p, Mb), lambda i: (0, i)),
            pl.BlockSpec((2 * Cout, 9 * Cin_p), lambda i: (0, 0)),
            pl.BlockSpec((Cout, 9 * Cout), lambda i: (0, 0)),
            pl.BlockSpec((2 * Cout, 1), lambda i: (0, 0)),
            pl.BlockSpec((2 * Cout, 1), lambda i: (0, 0)),
            pl.BlockSpec((Cout, 1), lambda i: (0, 0)),
        ],
        out_specs=pl.BlockSpec((Cout, Mb), lambda i: (0, i)),
        out_shape=jax.ShapeDtypeStruct((Cout, M), jnp.float32),
        compiler_params=cparams,
    )(x_flat, wc, w2, scale, shift, b2)

    return out   # lane-dense (Cout, N*H*W)


# ------------------------- pure-JAX reference -------------------------
def _conv_nhwc(x, w, b):
    y = lax.conv_general_dilated(
        x, w, window_strides=(1, 1),
        padding="SAME" if w.shape[0] == 3 else "VALID",
        dimension_numbers=("NHWC", "HWIO", "NHWC"))
    return y + b


def _bn_train(y, gamma, beta):
    mean = jnp.mean(y, axis=(0, 1, 2), keepdims=True)
    var = jnp.mean((y - mean) ** 2, axis=(0, 1, 2), keepdims=True)
    return (y - mean) * lax.rsqrt(var + EPS) * gamma + beta


def stem_reference(x_nchw, p):
    x = jnp.transpose(x_nchw, (0, 2, 3, 1))
    y = _conv_nhwc(x, p["w1"], p["b1"])
    y = jnp.maximum(_bn_train(y, p["g1"], p["be1"]), 0.0)
    y = _conv_nhwc(y, p["w2"], p["b2"])
    s = _conv_nhwc(x, p["ws"].reshape(1, 1, *p["ws"].shape), p["bs"])
    s = _bn_train(s, p["gs"], p["bes"])
    return jnp.transpose(y + s, (0, 3, 1, 2))


def make_params(key, cin, cout):
    ks = jax.random.split(key, 6)
    return {
        "w1": 0.1 * jax.random.normal(ks[0], (3, 3, cin, cout), jnp.float32),
        "b1": 0.05 * jax.random.normal(ks[1], (1, cout), jnp.float32),
        "g1": 1.0 + 0.05 * jnp.arange(cout, dtype=jnp.float32).reshape(1, cout) / cout,
        "be1": 0.02 * jnp.arange(cout, dtype=jnp.float32).reshape(1, cout) / cout,
        "w2": 0.1 * jax.random.normal(ks[2], (3, 3, cout, cout), jnp.float32),
        "b2": 0.05 * jax.random.normal(ks[3], (1, cout), jnp.float32),
        "ws": 0.1 * jax.random.normal(ks[4], (cin, cout), jnp.float32),
        "bs": 0.05 * jax.random.normal(ks[5], (1, cout), jnp.float32),
        "gs": 1.0 - 0.03 * jnp.arange(cout, dtype=jnp.float32).reshape(1, cout) / cout,
        "bes": -0.01 * jnp.arange(cout, dtype=jnp.float32).reshape(1, cout) / cout,
    }


if __name__ == "__main__":
    key = jax.random.PRNGKey(0)
    kx, kp = jax.random.split(key)
    N, Cin, H, W, Cout = 2, 3, 16, 16, 32   # Stem(in_channels=3, out_channels=32)

    x = jax.random.normal(kx, (N, Cin, H, W), jnp.float32)   # torch-style NCHW
    params = make_params(kp, Cin, Cout)

    ref_nchw = jax.block_until_ready(stem_reference(x, params))
    ref_cm = jnp.transpose(ref_nchw, (1, 0, 2, 3)).reshape(Cout, N * H * W)

    # f32 MXU path; force 2 spatial blocks to exercise the tiled grid and the
    # two-phase (cross-block) BatchNorm reduction.
    out = jax.block_until_ready(stem_forward(x, params, max_block_lanes=256))
    assert out.shape == (Cout, N * H * W)
    assert jnp.allclose(out, ref_cm, rtol=1e-4, atol=1e-4), \
        f"f32 max abs err {jnp.max(jnp.abs(out - ref_cm))}"
    assert jnp.allclose(lane_dense_to_nchw(out, N, H, W), ref_nchw,
                        rtol=1e-4, atol=1e-4)

    # bf16 MXU-operand path (f32 accumulate), single block; looser tolerance.
    out_bf = jax.block_until_ready(
        stem_forward(x, params, max_block_lanes=4096, mxu_dtype=jnp.bfloat16))
    assert jnp.allclose(out_bf, ref_cm, rtol=5e-2, atol=1e-1), \
        f"bf16 max abs err {jnp.max(jnp.abs(out_bf - ref_cm))}"

    print("KERNEL_OK")
</pallas_src>

<mosaic_0001>
module attributes {stable_mosaic.version = 11 : i64} {
  func.func @probe(%arg0: memref<8x128xf32, #tpu.memory_space<vmem>>, %arg1: memref<8x128xf32, #tpu.memory_space<vmem>>) attributes {dimension_semantics = [], scalar_prefetch = 0 : i64, scratch_operands = 0 : i64, tpu.core_type = #tpu.core_type<tc>} {
    %c0 = arith.constant 0 : index
    %c0_0 = arith.constant 0 : index
    %0 = vector.load %arg0[%c0, %c0_0] : memref<8x128xf32, #tpu.memory_space<vmem>>, vector<8x128xf32>
    %c1_i32 = arith.constant 1 : i32
    %1 = tpu.dynamic_rotate %0 by %c1_i32 dim 1 : vector<8x128xf32>, i32 -> vector<8x128xf32>
    %c0_1 = arith.constant 0 : index
    %c0_2 = arith.constant 0 : index
    %2 = vector.load %arg1[%c0_1, %c0_2] : memref<8x128xf32, #tpu.memory_space<vmem>>, vector<8x128xf32>
    tpu.vector_store %arg1[%c0_1, %c0_2], %1 {strides = array<i32>} : memref<8x128xf32, #tpu.memory_space<vmem>>, vector<8x128xf32>,
    return
  }
}

</mosaic_0001>

<llo_original>
// kernel: tpu_custom_call.1
$region0: #{tpu_custom_call.1}
  #allocation0 [shape = 'u32[]', space=smem, size = 0x4, offset = 0x4, fixed_abs, tag = 'smem constant byte address 0x4 - core index']
  #allocation1 [shape = 'u32[72,128]{1,0:T(1,128)}', space=vmem, size = 0x9000, scoped, tag = 'internal scratch']
  %s0 = inlined_call_operand.hbm [shape: f32[8,128], index: 0, kind: input, shape index: {}]
  %s1 = inlined_call_operand.hbm [shape: f32[8,128], index: 1, kind: output, shape index: {}]
  %s2 = sld [smem:[#allocation0]]
  $region18: #{tpu_custom_call.1} parent=0
    _
  %s4 = ssub.s32 1, %s2
  %s5 = scalar_select 0, %s4, %s2
  $region1: #{tpu_custom_call.1} parent=0
    #allocation2 [shape = 'u8[4096]{0}', space=vmem, size = 0x1000, scoped, tag = 'input window, operand 0, single buffered']
    #allocation3 [shape = 's32[1]{0}', space=sflag, size = 0x4, scoped, tag = 'scoped memory for tpu_custom_call.1']
    #allocation4 [shape = 's32[1]{0}', space=sflag, size = 0x4, scoped, tag = 'scoped memory for tpu_custom_call.1']
    #allocation5 [shape = 'u8[4096]{0}', space=vmem, size = 0x1000, scoped, tag = 'output window, operand 0, single buffered']
    %6 = vsyncpa [#allocation3], 0
    %7 = vsyncpa [#allocation4], 0
    // Predicated region
    $region2: #{tpu_custom_call.1} parent=1 // pred_check
      _
    $region3: #{tpu_custom_call.1} parent=1 // pred_check_branch
      %9 = sbr.rel (0) target = $region5
    $region4: #{tpu_custom_call.1} parent=1 // pred_region
      %11 = vsyncadd [#allocation3], 0
      %s13 = sshll.u32 %s0, 4
      %s14 = int_to_ptr.hbm [resolvable:$true] %s13
      %s15 = sshll.u32 [#allocation2], 4
      %s16 = int_to_ptr.vmem [resolvable:$true] %s15
      %18 = dma.hbm_to_vmem [thread:$0]  %s14, 128, %s16, [#allocation3]
    $region5: #{tpu_custom_call.1} parent=1 // pred_fallthru
      _
    // Predicated region
    $region6: #{tpu_custom_call.1} parent=1 // pred_check
      _
    $region7: #{tpu_custom_call.1} parent=1 // pred_check_branch
      %20 = sbr.rel (0) target = $region9
    $region8: #{tpu_custom_call.1} parent=1 // pred_region
      %22 = dma.done [#allocation3], 128
    $region9: #{tpu_custom_call.1} parent=1 // pred_fallthru
      _
    %v23 = vld [vmem:[#allocation2] sm:$0xff]
    %24 = vrot.lane.b32.xlu0 %v23, 1
    %v25 = vpop.permute.xlu0 %24
    %26 = vst [vmem:[#allocation5] sm:$0xff] %v25
    // Predicated region
    $region10: #{tpu_custom_call.1} parent=1 // pred_check
      _
    $region11: #{tpu_custom_call.1} parent=1 // pred_check_branch
      %28 = sbr.rel (0) target = $region13
    $region12: #{tpu_custom_call.1} parent=1 // pred_region
      %30 = vsyncadd [#allocation4], 0
      %s32 = sshll.u32 [#allocation5], 4
      %s33 = int_to_ptr.vmem [resolvable:$true] %s32
      %s34 = sshll.u32 %s1, 4
      %s35 = int_to_ptr.hbm [resolvable:$true] %s34
      %37 = dma.vmem_to_hbm [thread:$0]  %s33, 128, %s35, [#allocation4]
    $region13: #{tpu_custom_call.1} parent=1 // pred_fallthru
      _
    // Predicated region
    $region14: #{tpu_custom_call.1} parent=1 // pred_check
      _
    $region15: #{tpu_custom_call.1} parent=1 // pred_check_branch
      %39 = sbr.rel (0) target = $region17
    $region16: #{tpu_custom_call.1} parent=1 // pred_region
      %41 = dma.done [#allocation4], 128
    $region17: #{tpu_custom_call.1} parent=1 // pred_fallthru
      _
    %42 = vsyncpa [#allocation3], 1
    %43 = vsyncpa [#allocation4], 1

</llo_original>
